<compile_context>
chip_gen: v5e
topology: v5e:2x2
jax: 0.10.0
libtpu: 0.0.40
codegen_flags: <defaults>
</compile_context>

<pallas_src>
import functools

import jax
import jax.numpy as jnp
from jax.experimental import pallas as pl
from jax.experimental.pallas import tpu as pltpu


_LANE = 128                    # lane tile (minor-dim vector width)
_TILE_B = 256                  # batch rows per grid step (large-batch path)
_GRID_MIN_BATCH = 2 * _TILE_B  # below this, a grid is pure per-step overhead


def _round_up(n, m):
    return ((n + m - 1) // m) * m


def _fused_mlp_kernel(*refs, num_layers: int):
    """refs = (x_ref, w1_ref, b1_ref, ..., wn_ref, bn_ref, o_ref).

    x_ref : (rows, D0)        f32   (unpadded input features)
    wi_ref: (Din_i, Dout_i)   bf16  (hidden dims lane-padded to 128)
    bi_ref: (1, Dout_i)       f32
    o_ref : (rows, Dn)        f32   (unpadded output features)
    """
    x_ref = refs[0]
    o_ref = refs[-1]
    h = x_ref[...]                                     # f32
    for i in range(num_layers):
        w_ref = refs[1 + 2 * i]
        b_ref = refs[2 + 2 * i]
        # bf16 operands into the MXU, f32 accumulation; bias add / tanh in f32.
        h = jnp.dot(h.astype(w_ref.dtype), w_ref[...],
                    preferred_element_type=jnp.float32) + b_ref[...]
        if i < num_layers - 1:
            h = jnp.tanh(h)                            # hidden activation (EUP slot)
    o_ref[...] = h.astype(o_ref.dtype)                 # single cast, final store only


class PallasMLP:
    """JAX/Pallas equivalent of the PyTorch MLP module.

    activation = tanh, output_activation = None, output_squeeze = False
    (the defaults of the reference module).
    """

    def __init__(self, layers, key):
        self.layers = tuple(int(d) for d in layers)
        num_layers = len(self.layers) - 1
        self.params = []          # unpadded f32 (Din, Dout) / (Dout,), reference only
        self.padded_params = []   # bf16 (Din_p, Dout_p) weights, f32 (1, Dout_p) biases
        for i, (din, dout) in enumerate(zip(self.layers[:-1], self.layers[1:])):
            key, wkey = jax.random.split(key)
            # nn.Linear default weight init: U(-1/sqrt(fan_in), 1/sqrt(fan_in)).
            bound = 1.0 / (din ** 0.5)
            w = jax.random.uniform(wkey, (din, dout), dtype=jnp.float32,
                                   minval=-bound, maxval=bound)
            b = jnp.zeros((dout,), dtype=jnp.float32)   # nn.init.zeros_(bias)
            self.params.append((w, b))

            # Only HIDDEN feature dims are zero-padded to the 128-lane tile;
            # the network input dim and final output dim stay unpadded
            # (full-array blocks are exempt from the (8,128) rule), so the
            # wrapper needs no x padding and no output slice.  Zero padding is
            # semantics-preserving: padded output columns get 0 (+ bias 0),
            # tanh(0)=0, and the next layer's padded weight rows are 0, so
            # they never contribute.
            din_p = din if i == 0 else _round_up(din, _LANE)
            dout_p = dout if i == num_layers - 1 else _round_up(dout, _LANE)
            w_pad = (jnp.zeros((din_p, dout_p), jnp.float32)
                     .at[:din, :dout].set(w)
                     .astype(jnp.bfloat16))             # halves weight DMA
            b_pad = jnp.zeros((1, dout_p), jnp.float32).at[:, :dout].set(b)
            self.padded_params.append((w_pad, b_pad))

        self._flat_params = tuple(p for wb in self.padded_params for p in wb)
        self._forward_cache = {}   # jitted forward, keyed by batch size

    # ------------------------------------------------------------------ #

    def _param_bytes(self):
        return sum(int(w.size) * w.dtype.itemsize + int(b.size) * b.dtype.itemsize
                   for w, b in self.padded_params)

    def _vmem_limit_bytes(self, rows):
        # resident weights + double-buffered x/out blocks + per-layer f32
        # intermediate, plus headroom; clamped v7x-safe (64 MiB physical,
        # 32 MiB scoped default).
        d0, dn = self.layers[0], self.layers[-1]
        dmax = max(w.shape[1] for w, _ in self.padded_params)
        io_bytes = rows * (d0 + dn) * 4
        inter_bytes = rows * dmax * 4
        est = self._param_bytes() + 2 * io_bytes + 4 * inter_bytes + (2 << 20)
        return int(min(32 << 20, max(8 << 20, est)))

    def _cost_estimate(self, rows):
        flops = 2 * rows * sum(w.shape[0] * w.shape[1]
                               for w, _ in self.padded_params)
        transcendentals = rows * sum(w.shape[1]
                                     for w, _ in self.padded_params[:-1])
        bytes_accessed = (rows * self.layers[0] * 4 + self._param_bytes()
                          + rows * self.layers[-1] * 4)
        return pl.CostEstimate(flops=int(flops),
                               transcendentals=int(transcendentals),
                               bytes_accessed=int(bytes_accessed))

    # ------------------------------------------------------------------ #

    def _build_forward(self, batch):
        num_layers = len(self.padded_params)
        d0, dn = self.layers[0], self.layers[-1]
        kernel = functools.partial(_fused_mlp_kernel, num_layers=num_layers)

        if batch < _GRID_MIN_BATCH:
            # Gridless: unpadded x / out as single full-array blocks,
            # weights/biases resident; everything far below the VMEM budget.
            in_specs = [pl.BlockSpec((batch, d0), lambda: (0, 0))]
            for w_pad, b_pad in self.padded_params:
                in_specs.append(pl.BlockSpec(w_pad.shape, lambda: (0, 0)))
                in_specs.append(pl.BlockSpec(b_pad.shape, lambda: (0, 0)))
            call = pl.pallas_call(
                kernel,
                out_shape=jax.ShapeDtypeStruct((batch, dn), jnp.float32),
                in_specs=in_specs,
                out_specs=pl.BlockSpec((batch, dn), lambda: (0, 0)),
                compiler_params=pltpu.CompilerParams(
                    vmem_limit_bytes=self._vmem_limit_bytes(batch)),
                cost_estimate=self._cost_estimate(batch),
            )

            def fwd(x, *flat_params):
                return call(x, *flat_params)

            return fwd

        # Large batch: 1-D "parallel" batch grid; weights/biases stay resident
        # (constant index_map), x/out blocks double-buffer, and v7x's two
        # TensorCores split the grid steps.
        batch_pad = _round_up(batch, _TILE_B)
        grid = (batch_pad // _TILE_B,)
        in_specs = [pl.BlockSpec((_TILE_B, d0), lambda i: (i, 0))]
        for w_pad, b_pad in self.padded_params:
            in_specs.append(pl.BlockSpec(w_pad.shape, lambda i: (0, 0)))
            in_specs.append(pl.BlockSpec(b_pad.shape, lambda i: (0, 0)))
        call = pl.pallas_call(
            kernel,
            out_shape=jax.ShapeDtypeStruct((batch_pad, dn), jnp.float32),
            grid=grid,
            in_specs=in_specs,
            out_specs=pl.BlockSpec((_TILE_B, dn), lambda i: (i, 0)),
            compiler_params=pltpu.CompilerParams(
                dimension_semantics=("parallel",),
                vmem_limit_bytes=self._vmem_limit_bytes(_TILE_B)),
            cost_estimate=self._cost_estimate(batch_pad),
        )

        def fwd(x, *flat_params):
            # Zero-pad batch rows (fused inside jit), slice them off after.
            x_pad = jnp.pad(x, ((0, batch_pad - batch), (0, 0)))
            out = call(x_pad, *flat_params)
            return out[:batch]

        return fwd

    def _get_forward(self, batch):
        fwd = self._forward_cache.get(batch)
        if fwd is None:
            fwd = jax.jit(self._build_forward(batch))
            self._forward_cache[batch] = fwd
        return fwd

    def __call__(self, x):
        batch, d0 = x.shape
        assert d0 == self.layers[0]
        # output_squeeze=False in the reference module -> no squeeze.
        return self._get_forward(batch)(x, *self._flat_params)


# ----------------------------- references ------------------------------- #

def _reference_mlp_f32(params, x):
    """Pure-f32 jnp forward with the unpadded module parameters."""
    for w, b in params[:-1]:
        x = jnp.tanh(x @ w + b)
    w, b = params[-1]
    return x @ w + b


def _reference_mlp_matched(padded_params, x):
    """jnp forward reproducing the kernel's numerics (bf16 operands, f32
    accumulation, padded hidden dims)."""
    h = x
    n = len(padded_params)
    for i, (w, b) in enumerate(padded_params):
        h = jnp.dot(h.astype(w.dtype), w,
                    preferred_element_type=jnp.float32) + b
        if i < n - 1:
            h = jnp.tanh(h)
    return h


if __name__ == "__main__":
    key = jax.random.PRNGKey(0)
    key, pkey, xkey, xkey2 = jax.random.split(key, 4)

    layer_sizes = [16, 32, 32, 8]           # MLP([16, 32, 32, 8])
    mlp = PallasMLP(layer_sizes, pkey)

    # --- small batch: gridless fused kernel (module's typical use) -------
    batch = 4
    x = jax.random.normal(xkey, (batch, layer_sizes[0]), dtype=jnp.float32)
    out = jax.block_until_ready(mlp(x))
    assert out.shape == (batch, layer_sizes[-1])
    ref_tight = _reference_mlp_matched(mlp.padded_params, x)
    ref_f32 = _reference_mlp_f32(mlp.params, x)
    assert jnp.allclose(out, ref_tight, atol=1e-4, rtol=1e-4)     # exact numerics
    assert jnp.allclose(out, ref_f32, atol=5e-2, rtol=5e-2)       # bf16 envelope

    # --- larger batch: "parallel" batch-grid path, resident weights ------
    batch2 = 520                            # exercises padding to a TILE_B multiple
    x2 = jax.random.normal(xkey2, (batch2, layer_sizes[0]), dtype=jnp.float32)
    out2 = jax.block_until_ready(mlp(x2))
    assert out2.shape == (batch2, layer_sizes[-1])
    ref2_tight = _reference_mlp_matched(mlp.padded_params, x2)
    ref2_f32 = _reference_mlp_f32(mlp.params, x2)
    assert jnp.allclose(out2, ref2_tight, atol=1e-4, rtol=1e-4)
    assert jnp.allclose(out2, ref2_f32, atol=5e-2, rtol=5e-2)

    print("KERNEL_OK")
</pallas_src>

<mosaic_0001>
module attributes {stable_mosaic.version = 11 : i64} {
  func.func @_fused_mlp_kernel(%arg0: memref<4x16xf32, #tpu.memory_space<vmem>>, %arg1: memref<16x128xbf16, #tpu.memory_space<vmem>>, %arg2: memref<1x128xf32, #tpu.memory_space<vmem>>, %arg3: memref<128x128xbf16, #tpu.memory_space<vmem>>, %arg4: memref<1x128xf32, #tpu.memory_space<vmem>>, %arg5: memref<128x8xbf16, #tpu.memory_space<vmem>>, %arg6: memref<1x8xf32, #tpu.memory_space<vmem>>, %arg7: memref<4x8xf32, #tpu.memory_space<vmem>>) attributes {dimension_semantics = [], scalar_prefetch = 0 : i64, scratch_operands = 0 : i64, tpu.core_type = #tpu.core_type<tc>} {
    %c0 = arith.constant 0 : index
    %c0_0 = arith.constant 0 : index
    %0 = vector.load %arg0[%c0, %c0_0] : memref<4x16xf32, #tpu.memory_space<vmem>>, vector<4x16xf32>
    %1 = arith.truncf %0 : vector<4x16xf32> to vector<4x16xbf16>
    %c0_1 = arith.constant 0 : index
    %c0_2 = arith.constant 0 : index
    %2 = vector.load %arg1[%c0_1, %c0_2] : memref<16x128xbf16, #tpu.memory_space<vmem>>, vector<16x128xbf16>
    %cst = arith.constant dense<0.000000e+00> : vector<4x128xf32>
    %3 = tpu.matmul %1, %2, %cst {dimension_numbers = #tpu.dot_dimension_numbers<[1], [0], [0], [1], [0, 0, 1, 1], [], []>} : vector<4x16xbf16>, vector<16x128xbf16>, vector<4x128xf32> -> vector<4x128xf32>
    %c0_3 = arith.constant 0 : index
    %c0_4 = arith.constant 0 : index
    %4 = vector.load %arg2[%c0_3, %c0_4] : memref<1x128xf32, #tpu.memory_space<vmem>>, vector<1x128xf32>
    %5 = vector.broadcast %4 : vector<1x128xf32> to vector<4x128xf32>
    %6 = arith.addf %3, %5 : vector<4x128xf32>
    %7 = math.tanh %6 : vector<4x128xf32>
    %8 = arith.truncf %7 : vector<4x128xf32> to vector<4x128xbf16>
    %c0_5 = arith.constant 0 : index
    %c0_6 = arith.constant 0 : index
    %9 = vector.load %arg3[%c0_5, %c0_6] : memref<128x128xbf16, #tpu.memory_space<vmem>>, vector<128x128xbf16>
    %cst_7 = arith.constant dense<0.000000e+00> : vector<4x128xf32>
    %10 = tpu.matmul %8, %9, %cst_7 {dimension_numbers = #tpu.dot_dimension_numbers<[1], [0], [0], [1], [0, 0, 1, 1], [], []>} : vector<4x128xbf16>, vector<128x128xbf16>, vector<4x128xf32> -> vector<4x128xf32>
    %c0_8 = arith.constant 0 : index
    %c0_9 = arith.constant 0 : index
    %11 = vector.load %arg4[%c0_8, %c0_9] : memref<1x128xf32, #tpu.memory_space<vmem>>, vector<1x128xf32>
    %12 = vector.broadcast %11 : vector<1x128xf32> to vector<4x128xf32>
    %13 = arith.addf %10, %12 : vector<4x128xf32>
    %14 = math.tanh %13 : vector<4x128xf32>
    %15 = arith.truncf %14 : vector<4x128xf32> to vector<4x128xbf16>
    %c0_10 = arith.constant 0 : index
    %c0_11 = arith.constant 0 : index
    %16 = vector.load %arg5[%c0_10, %c0_11] : memref<128x8xbf16, #tpu.memory_space<vmem>>, vector<128x8xbf16>
    %cst_12 = arith.constant dense<0.000000e+00> : vector<4x8xf32>
    %17 = tpu.matmul %15, %16, %cst_12 {dimension_numbers = #tpu.dot_dimension_numbers<[1], [0], [0], [1], [0, 0, 1, 1], [], []>} : vector<4x128xbf16>, vector<128x8xbf16>, vector<4x8xf32> -> vector<4x8xf32>
    %c0_13 = arith.constant 0 : index
    %c0_14 = arith.constant 0 : index
    %18 = vector.load %arg6[%c0_13, %c0_14] : memref<1x8xf32, #tpu.memory_space<vmem>>, vector<1x8xf32>
    %19 = vector.broadcast %18 : vector<1x8xf32> to vector<4x8xf32>
    %20 = arith.addf %17, %19 : vector<4x8xf32>
    %c0_15 = arith.constant 0 : index
    %c0_16 = arith.constant 0 : index
    %21 = vector.load %arg7[%c0_15, %c0_16] : memref<4x8xf32, #tpu.memory_space<vmem>>, vector<4x8xf32>
    tpu.vector_store %arg7[%c0_15, %c0_16], %20 {strides = array<i32>} : memref<4x8xf32, #tpu.memory_space<vmem>>, vector<4x8xf32>,
    return
  }
}

</mosaic_0001>

<llo_original>
// kernel: fwd.1
$region0: #{fwd.1}
  #allocation0 [shape = 'u32[]', space=smem, size = 0x4, offset = 0x4, fixed_abs, tag = 'smem constant byte address 0x4 - core index']
  #allocation1 [shape = 'u32[72,128]{1,0:T(1,128)}', space=vmem, size = 0x9000, scoped, tag = 'internal scratch']
  %s0 = inlined_call_operand.vmem [shape: f32[4,16], index: 0, kind: input, shape index: {}]
  %s1 = inlined_call_operand.hbm [shape: bf16[16,128], index: 1, kind: input, shape index: {}]
  %s2 = inlined_call_operand.hbm [shape: f32[1,128], index: 2, kind: input, shape index: {}]
  %s3 = inlined_call_operand.vmem [shape: bf16[128,128], index: 3, kind: input, shape index: {}]
  %s4 = inlined_call_operand.hbm [shape: f32[1,128], index: 4, kind: input, shape index: {}]
  %s5 = inlined_call_operand.vmem [shape: bf16[128,8], index: 5, kind: input, shape index: {}]
  %s6 = inlined_call_operand.vmem [shape: f32[1,8], index: 6, kind: input, shape index: {}]
  %s7 = inlined_call_operand.hbm [shape: f32[4,8], index: 7, kind: output, shape index: {}]
  %s8 = sld [smem:[#allocation0]]
  $region50: #{fwd.1} parent=0
    _
  %s10 = ssub.s32 1, %s8
  %s11 = scalar_select 0, %s10, %s8
  $region1: #{fwd.1} parent=0
    #allocation2 [shape = 'u8[4096]{0}', space=vmem, size = 0x1000, scoped, tag = 'input window, operand 1, single buffered']
    #allocation3 [shape = 's32[1]{0}', space=sflag, size = 0x4, scoped, tag = 'scoped memory for fwd.1']
    #allocation4 [shape = 's32[1]{0}', space=sflag, size = 0x4, scoped, tag = 'scoped memory for fwd.1']
    #allocation5 [shape = 'u8[512]{0}', space=vmem, size = 0x400, scoped, tag = 'input window, operand 2, single buffered']
    #allocation6 [shape = 's32[1]{0}', space=sflag, size = 0x4, scoped, tag = 'scoped memory for fwd.1']
    #allocation7 [shape = 'u8[512]{0}', space=vmem, size = 0x400, scoped, tag = 'input window, operand 4, single buffered']
    #allocation8 [shape = 'u8[2048]{0}', space=vmem, size = 0x800, scoped, tag = 'output window, operand 0, single buffered']
    %12 = vsyncpa [#allocation3], 0
    %13 = vsyncpa [#allocation6], 0
    %14 = vsyncpa [#allocation4], 0
    // Predicated region
    $region2: #{fwd.1} parent=1 // pred_check
      _
    $region3: #{fwd.1} parent=1 // pred_check_branch
      %16 = sbr.rel (0) target = $region5
    $region4: #{fwd.1} parent=1 // pred_region
      _
    $region5: #{fwd.1} parent=1 // pred_fallthru
      _
    // Predicated region
    $region6: #{fwd.1} parent=1 // pred_check
      _
    $region7: #{fwd.1} parent=1 // pred_check_branch
      %18 = sbr.rel (0) target = $region9
    $region8: #{fwd.1} parent=1 // pred_region
      %20 = vsyncadd [#allocation3], 0
      %s21 = sshll.u32 %s1, 4
      %s22 = int_to_ptr.hbm [resolvable:$true] %s21
      %s23 = sshll.u32 [#allocation2], 4
      %s24 = int_to_ptr.vmem [resolvable:$true] %s23
      %29 = dma.hbm_to_vmem [thread:$0]  %s22, 128, %s24, [#allocation3], 64, 64, 4
    $region9: #{fwd.1} parent=1 // pred_fallthru
      _
    // Predicated region
    $region10: #{fwd.1} parent=1 // pred_check
      _
    $region11: #{fwd.1} parent=1 // pred_check_branch
      %31 = sbr.rel (0) target = $region13
    $region12: #{fwd.1} parent=1 // pred_region
      %33 = vsyncadd [#allocation6], 0
      %s35 = sshll.u32 %s2, 4
      %s36 = int_to_ptr.hbm [resolvable:$true] %s35
      %s37 = sshll.u32 [#allocation5], 4
      %s38 = int_to_ptr.vmem [resolvable:$true] %s37
      %40 = dma.hbm_to_vmem [thread:$0]  %s36, 16, %s38, [#allocation6]
    $region13: #{fwd.1} parent=1 // pred_fallthru
      _
    // Predicated region
    $region14: #{fwd.1} parent=1 // pred_check
      _
    $region15: #{fwd.1} parent=1 // pred_check_branch
      %42 = sbr.rel (0) target = $region17
    $region16: #{fwd.1} parent=1 // pred_region
      _
    $region17: #{fwd.1} parent=1 // pred_fallthru
      _
    // Predicated region
    $region18: #{fwd.1} parent=1 // pred_check
      _
    $region19: #{fwd.1} parent=1 // pred_check_branch
      %44 = sbr.rel (0) target = $region21
    $region20: #{fwd.1} parent=1 // pred_region
      %46 = vsyncadd [#allocation6], 0
      %s48 = sshll.u32 %s4, 4
      %s49 = int_to_ptr.hbm [resolvable:$true] %s48
      %s50 = sshll.u32 [#allocation7], 4
      %s51 = int_to_ptr.vmem [resolvable:$true] %s50
      %53 = dma.hbm_to_vmem [thread:$0]  %s49, 16, %s51, [#allocation6]
    $region21: #{fwd.1} parent=1 // pred_fallthru
      _
    // Predicated region
    $region22: #{fwd.1} parent=1 // pred_check
      _
    $region23: #{fwd.1} parent=1 // pred_check_branch
      %55 = sbr.rel (0) target = $region25
    $region24: #{fwd.1} parent=1 // pred_region
      _
    $region25: #{fwd.1} parent=1 // pred_fallthru
      _
    // Predicated region
    $region26: #{fwd.1} parent=1 // pred_check
      _
    $region27: #{fwd.1} parent=1 // pred_check_branch
      %57 = sbr.rel (0) target = $region29
    $region28: #{fwd.1} parent=1 // pred_region
      _
    $region29: #{fwd.1} parent=1 // pred_fallthru
      _
    // Predicated region
    $region30: #{fwd.1} parent=1 // pred_check
      _
    $region31: #{fwd.1} parent=1 // pred_check_branch
      %59 = sbr.rel (0) target = $region33
    $region32: #{fwd.1} parent=1 // pred_region
      %61 = dma.done [#allocation3], 128
    $region33: #{fwd.1} parent=1 // pred_fallthru
      _
    // Predicated region
    $region34: #{fwd.1} parent=1 // pred_check
      _
    $region35: #{fwd.1} parent=1 // pred_check_branch
      %63 = sbr.rel (0) target = $region37
    $region36: #{fwd.1} parent=1 // pred_region
      %65 = dma.done [#allocation6], 16
    $region37: #{fwd.1} parent=1 // pred_fallthru
      _
    // Predicated region
    $region38: #{fwd.1} parent=1 // pred_check
      _
    $region39: #{fwd.1} parent=1 // pred_check_branch
      %67 = sbr.rel (0) target = $region41
    $region40: #{fwd.1} parent=1 // pred_region
      %69 = dma.done [#allocation6], 16
    $region41: #{fwd.1} parent=1 // pred_fallthru
      _
    %v71 = vld [vmem:[%s0] sm:$0xf]
    %v72 = vpack.c.bf16 %v71, %v71
    %v73 = vld [vmem:[#allocation2] sm:$0xf]
    %v74 = vld [vmem:[#allocation2 + $0x4] sm:$0xf]
    %v75 = vld [vmem:[#allocation5] sm:$0x1]
    %v77 = vperm.slane %v75, 0
    %v81 = vunpack.c.l.b16 %v73
    %v82 = vunpack.c.l.b16 %v74
    %v83 = vpack.c.b16 %v82, %v81
    %vm85 = vcmask 130048
    %v87 = vsel %vm85, %v72, 0
    %89 = vmatpush.bf16.msra.mxu0 0
    %90 = vmatpush.bf16.msra.mxu0 0
    %91 = vmatpush.bf16.msra.mxu0 0
    %92 = vmatpush.bf16.msra.mxu0 0
    %93 = vmatpush.bf16.msra.mxu0 0
    %94 = vmatpush.bf16.msra.mxu0 0
    %95 = vmatpush.bf16.msra.mxu0 0
    %96 = vmatpush.bf16.msra.mxu0 %v83
    %97 = vmatmul.bf16.gmra.mxu0 %v87
    %v98 = vpop.f32.mrf.mxu0
    %v99 = vadd.f32 %v77, %v98
    %v100 = vpop.f32.mrf.mxu0
    %101 = vdwg.mxu0
    %v102 = vtanh.pop %v99
    %v103 = vpack.c.bf16 %v102, %v102
    %v104 = vld [vmem:[%s3] sm:$0xf]
    %v105 = vld [vmem:[%s3 + $0x4] sm:$0xf]
    %v106 = vld [vmem:[%s3 + $0x8] sm:$0xf]
    %v107 = vld [vmem:[%s3 + $0xc] sm:$0xf]
    %v108 = vld [vmem:[%s3 + $0x10] sm:$0xf]
    %v109 = vld [vmem:[%s3 + $0x14] sm:$0xf]
    %v110 = vld [vmem:[%s3 + $0x18] sm:$0xf]
    %v111 = vld [vmem:[%s3 + $0x1c] sm:$0xf]
    %v112 = vld [vmem:[%s3 + $0x20] sm:$0xf]
    %v113 = vld [vmem:[%s3 + $0x24] sm:$0xf]
    %v114 = vld [vmem:[%s3 + $0x28] sm:$0xf]
    %v115 = vld [vmem:[%s3 + $0x2c] sm:$0xf]
    %v116 = vld [vmem:[%s3 + $0x30] sm:$0xf]
    %v117 = vld [vmem:[%s3 + $0x34] sm:$0xf]
    %v118 = vld [vmem:[%s3 + $0x38] sm:$0xf]
    %v119 = vld [vmem:[%s3 + $0x3c] sm:$0xf]
    %v120 = vld [vmem:[#allocation7] sm:$0x1]
    %v122 = vperm.slane %v120, 0
    %v140 = vunpack.c.l.b16 %v104
    %v141 = vunpack.c.l.b16 %v105
    %v142 = vunpack.c.l.b16 %v106
    %v143 = vunpack.c.l.b16 %v107
    %v144 = vunpack.c.l.b16 %v108
    %v145 = vunpack.c.l.b16 %v109
    %v146 = vunpack.c.l.b16 %v110
    %v147 = vunpack.c.l.b16 %v111
    %v148 = vunpack.c.l.b16 %v112
    %v149 = vunpack.c.l.b16 %v113
    %v150 = vunpack.c.l.b16 %v114
    %v151 = vunpack.c.l.b16 %v115
    %v152 = vunpack.c.l.b16 %v116
    %v153 = vunpack.c.l.b16 %v117
    %v154 = vunpack.c.l.b16 %v118
    %v155 = vunpack.c.l.b16 %v119
    %v156 = vpack.c.b16 %v141, %v140
    %v157 = vpack.c.b16 %v143, %v142
    %v158 = vpack.c.b16 %v145, %v144
    %v159 = vpack.c.b16 %v147, %v146
    %v160 = vpack.c.b16 %v149, %v148
    %v161 = vpack.c.b16 %v151, %v150
    %v162 = vpack.c.b16 %v153, %v152
    %v163 = vpack.c.b16 %v155, %v154
    %172 = vmatpush.bf16.msra.mxu0 %v163
    %173 = vmatpush.bf16.msra.mxu0 %v162
    %174 = vmatpush.bf16.msra.mxu0 %v161
    %175 = vmatpush.bf16.msra.mxu0 %v160
    %176 = vmatpush.bf16.msra.mxu0 %v159
    %177 = vmatpush.bf16.msra.mxu0 %v158
    %178 = vmatpush.bf16.msra.mxu0 %v157
    %179 = vmatpush.bf16.msra.mxu0 %v156
    %180 = vmatmul.bf16.gmra.mxu0 %v103
    %v181 = vpop.f32.mrf.mxu0
    %v182 = vadd.f32 %v122, %v181
    %v183 = vpop.f32.mrf.mxu0
    %184 = vdwg.mxu0
    %v185 = vtanh.pop %v182
    %v186 = vpack.c.bf16 %v185, %v185
    %v187 = vld [vmem:[%s5] sm:$0xf]
    %v188 = vld [vmem:[%s5 + $0x4] sm:$0xf]
    %v189 = vld [vmem:[%s5 + $0x8] sm:$0xf]
    %v190 = vld [vmem:[%s5 + $0xc] sm:$0xf]
    %v191 = vld [vmem:[%s5 + $0x10] sm:$0xf]
    %v192 = vld [vmem:[%s5 + $0x14] sm:$0xf]
    %v193 = vld [vmem:[%s5 + $0x18] sm:$0xf]
    %v194 = vld [vmem:[%s5 + $0x1c] sm:$0xf]
    %v195 = vld [vmem:[%s5 + $0x20] sm:$0xf]
    %v196 = vld [vmem:[%s5 + $0x24] sm:$0xf]
    %v197 = vld [vmem:[%s5 + $0x28] sm:$0xf]
    %v198 = vld [vmem:[%s5 + $0x2c] sm:$0xf]
    %v199 = vld [vmem:[%s5 + $0x30] sm:$0xf]
    %v200 = vld [vmem:[%s5 + $0x34] sm:$0xf]
    %v201 = vld [vmem:[%s5 + $0x38] sm:$0xf]
    %v202 = vld [vmem:[%s5 + $0x3c] sm:$0xf]
    %v203 = vld [vmem:[%s6] sm:$0x1]
    %v205 = vperm.slane %v203, 0
    %v223 = vunpack.c.l.b16 %v187
    %v224 = vunpack.c.l.b16 %v188
    %v225 = vunpack.c.l.b16 %v189
    %v226 = vunpack.c.l.b16 %v190
    %v227 = vunpack.c.l.b16 %v191
    %v228 = vunpack.c.l.b16 %v192
    %v229 = vunpack.c.l.b16 %v193
    %v230 = vunpack.c.l.b16 %v194
    %v231 = vunpack.c.l.b16 %v195
    %v232 = vunpack.c.l.b16 %v196
    %v233 = vunpack.c.l.b16 %v197
    %v234 = vunpack.c.l.b16 %v198
    %v235 = vunpack.c.l.b16 %v199
    %v236 = vunpack.c.l.b16 %v200
    %v237 = vunpack.c.l.b16 %v201
    %v238 = vunpack.c.l.b16 %v202
    %v239 = vpack.c.b16 %v224, %v223
    %v240 = vpack.c.b16 %v226, %v225
    %v241 = vpack.c.b16 %v228, %v227
    %v242 = vpack.c.b16 %v230, %v229
    %v243 = vpack.c.b16 %v232, %v231
    %v244 = vpack.c.b16 %v234, %v233
    %v245 = vpack.c.b16 %v236, %v235
    %v246 = vpack.c.b16 %v238, %v237
    %255 = vmatpush.bf16.msra.mxu0 %v246
    %256 = vmatpush.bf16.msra.mxu0 %v245
    %257 = vmatpush.bf16.msra.mxu0 %v244
    %258 = vmatpush.bf16.msra.mxu0 %v243
    %259 = vmatpush.bf16.msra.mxu0 %v242
    %260 = vmatpush.bf16.msra.mxu0 %v241
    %261 = vmatpush.bf16.msra.mxu0 %v240
    %262 = vmatpush.bf16.msra.mxu0 %v239
    %263 = vmatmul.bf16.gmra.mxu0 %v186
    %v264 = vpop.f32.mrf.mxu0
    %v265 = vadd.f32 %v205, %v264
    %v266 = vpop.f32.mrf.mxu0
    %267 = vdwg.mxu0
    %vm268 = vcmask 60416
    %269 = vst.msk [vmem:[#allocation8] sm:$0xf] %vm268, %v265
    // Predicated region
    $region42: #{fwd.1} parent=1 // pred_check
      _
    $region43: #{fwd.1} parent=1 // pred_check_branch
      %271 = sbr.rel (0) target = $region45
    $region44: #{fwd.1} parent=1 // pred_region
      %273 = vsyncadd [#allocation4], 0
      %s275 = sshll.u32 [#allocation8], 4
      %s276 = int_to_ptr.vmem [resolvable:$true] %s275
      %s277 = sshll.u32 %s7, 4
      %s278 = int_to_ptr.hbm [resolvable:$true] %s277
      %280 = dma.vmem_to_hbm [thread:$0]  %s276, 64, %s278, [#allocation4]
    $region45: #{fwd.1} parent=1 // pred_fallthru
      _
    // Predicated region
    $region46: #{fwd.1} parent=1 // pred_check
      _
    $region47: #{fwd.1} parent=1 // pred_check_branch
      %282 = sbr.rel (0) target = $region49
    $region48: #{fwd.1} parent=1 // pred_region
      %284 = dma.done [#allocation4], 64
    $region49: #{fwd.1} parent=1 // pred_fallthru
      _
    %285 = vsyncpa [#allocation3], 1
    %286 = vsyncpa [#allocation6], 1
    %287 = vsyncpa [#allocation4], 1

</llo_original>
